<compile_context>
chip_gen: v7x
topology: tpu7x:2x2x1
jax: 0.10.0
libtpu: 0.0.40
codegen_flags: <defaults>
</compile_context>

<pallas_src>
import jax
import jax.numpy as jnp
from jax.experimental import pallas as pl
from jax.experimental.pallas import tpu as pltpu


def pgn_kernel(xg_ref, w1g_ref, b1g_ref, w2g_ref, b2g_ref, a_ref, c_ref, out_ref):
    # xg_ref : (tbg, G*D)  streamed state tile, G samples packed along lanes
    # w1g_ref: (G*D, G*H)  block-diag kron(I_G, W1^T)          (resident)
    # b1g_ref: (1,   G*H)  fc1 bias tiled per group             (resident)
    # w2g_ref: (G*H, G)    block-diag kron(I_G, w2[0]-w2[1])    (resident)
    # b2g_ref: (1,   G)    fc2 bias difference per group        (resident)
    # a_ref  : (G,   2G)   scatter matrix  p1 -> (-p1, +p1) per sample (resident)
    # c_ref  : (1,   2G)   constant (+1 on even lanes) so out = (1-p1, p1)
    # out_ref: (tbg, 2G)   lane-dense softmax probabilities
    x = xg_ref[...]                                                    # (tbg, G*D)

    # hid = tanh(W1 @ x + b1), all G samples of a row at once        -> (tbg, G*H)
    h = jnp.tanh(
        jnp.dot(x, w1g_ref[...], preferred_element_type=jnp.float32) + b1g_ref[...]
    )

    # d = logit0 - logit1 per sample                                  -> (tbg, G)
    d = jnp.dot(h, w2g_ref[...], preferred_element_type=jnp.float32) + b2g_ref[...]

    # 2-class softmax == sigmoid of the logit difference:
    #   p1 = 1 / (1 + exp(l0 - l1)),  p0 = 1 - p1   (no cross-lane reductions)
    p1 = 1.0 / (1.0 + jnp.exp(d))                                      # (tbg, G)

    # Interleave (p0, p1) per sample via one tiny MXU scatter matmul  -> (tbg, 2G)
    out_ref[...] = (
        jnp.dot(p1, a_ref[...], preferred_element_type=jnp.float32) + c_ref[...]
    )


def _round_up(x, m):
    return ((x + m - 1) // m) * m


def _group_size(input_dim):
    # Smallest power-of-two G with G*input_dim >= 128 (one full lane tile).
    if input_dim >= 128:
        return 1
    g = 1
    while g * input_dim < 128:
        g *= 2
    return g


def policy_gradient_network(state, w1, b1, w2, b2, *, tb=32768):
    """Forward pass of PolicyGradientNetwork.

    state: (B, input_dim) f32   (natural PyTorch layout, consumed as-is)
    w1:    (H, input_dim) f32   (nn.Linear weight layout, H = 4)
    b1:    (H,) f32
    w2:    (2, H) f32
    b2:    (2,) f32
    returns: (B, 2) f32 softmax probabilities
    """
    B, D = state.shape
    H = w1.shape[0]
    assert w2.shape == (2, H) and b1.shape == (H,) and b2.shape == (2,)

    G = _group_size(D)
    f32 = jnp.float32

    # ---- zero-copy grouped (lane-dense) view of the state -------------------
    Bp = _round_up(B, G)
    xg = state if Bp == B else jnp.pad(state, ((0, Bp - B), (0, 0)))  # fallback only
    xg = xg.reshape(Bp // G, G * D)          # row-major => free reshape when Bp == B
    Bg = Bp // G

    # ---- fold fc1 / fc2-difference / softmax interleave into resident mats --
    eye = jnp.eye(G, dtype=f32)
    w1g = jnp.kron(eye, w1.T.astype(f32))                    # (G*D, G*H)
    b1g = jnp.tile(b1.astype(f32).reshape(1, H), (1, G))     # (1,   G*H)
    w2d = (w2[0] - w2[1]).astype(f32).reshape(H, 1)          # logit-difference row
    b2d = (b2[0] - b2[1]).astype(f32)
    w2g = jnp.kron(eye, w2d)                                 # (G*H, G)
    b2g = jnp.full((1, G), b2d, dtype=f32)                   # (1,   G)
    a = jnp.kron(eye, jnp.array([[-1.0, 1.0]], dtype=f32))   # (G,   2G)
    c = jnp.tile(jnp.array([[1.0, 0.0]], dtype=f32), (1, G)) # (1,   2G)

    # ---- batch-tile selection ------------------------------------------------
    tbg = max(1, tb // G)                     # grouped rows per tile
    tbg = _round_up(tbg, 8)
    tbg = min(tbg, 4096)                      # keep double-buffered tiles < 32 MiB VMEM
    if Bg > 8:
        # Keep >= 2 grid tiles so ("parallel",) can spread across both v7x TCs.
        tbg = min(tbg, _round_up(pl.cdiv(Bg, 2), 8))
    if tbg >= Bg:
        tbg = Bg                              # single full-extent block
    grid = (pl.cdiv(Bg, tbg),)                # partial last block allowed (no pad)

    out_g = pl.pallas_call(
        pgn_kernel,
        out_shape=jax.ShapeDtypeStruct((Bg, 2 * G), jnp.float32),
        grid=grid,
        in_specs=[
            pl.BlockSpec((tbg, G * D), lambda i: (i, 0)),     # streamed state tiles
            pl.BlockSpec((G * D, G * H), lambda i: (0, 0)),   # resident folded weights
            pl.BlockSpec((1, G * H), lambda i: (0, 0)),
            pl.BlockSpec((G * H, G), lambda i: (0, 0)),
            pl.BlockSpec((1, G), lambda i: (0, 0)),
            pl.BlockSpec((G, 2 * G), lambda i: (0, 0)),
            pl.BlockSpec((1, 2 * G), lambda i: (0, 0)),
        ],
        out_specs=pl.BlockSpec((tbg, 2 * G), lambda i: (i, 0)),
        compiler_params=pltpu.CompilerParams(
            dimension_semantics=("parallel",),     # batch tiles are independent
            vmem_limit_bytes=32 * 1024 * 1024,     # raise v5e's 16 MiB scoped default
        ),
    )(xg, w1g, b1g, w2g, b2g, a, c)

    probs = out_g.reshape(Bp, 2)              # row-major => free reshape
    return probs if Bp == B else probs[:B]


def init_params(key, input_dim):
    # Deterministic init mimicking torch.nn.Linear default (uniform +/- 1/sqrt(fan_in)).
    k1, k2, k3, k4 = jax.random.split(key, 4)
    lim1 = 1.0 / jnp.sqrt(jnp.float32(input_dim))
    lim2 = 1.0 / jnp.sqrt(jnp.float32(4.0))
    w1 = jax.random.uniform(k1, (4, input_dim), jnp.float32, -lim1, lim1)
    b1 = jax.random.uniform(k2, (4,), jnp.float32, -lim1, lim1)
    w2 = jax.random.uniform(k3, (2, 4), jnp.float32, -lim2, lim2)
    b2 = jax.random.uniform(k4, (2,), jnp.float32, -lim2, lim2)
    return w1, b1, w2, b2


def reference_forward(state, w1, b1, w2, b2):
    hp = jax.lax.Precision.HIGHEST
    h = jnp.tanh(jnp.dot(state, w1.T, precision=hp) + b1)
    logits = jnp.dot(h, w2.T, precision=hp) + b2
    return jax.nn.softmax(logits, axis=-1)


if __name__ == "__main__":
    # window_size=10 with 2 signal features (Close, Open) -> input_dim = 20
    B, INPUT_DIM = 1024, 20
    key = jax.random.PRNGKey(0)
    k_x, k_p, k_x2 = jax.random.split(key, 3)
    state = jax.random.normal(k_x, (B, INPUT_DIM), jnp.float32)
    w1, b1, w2, b2 = init_params(k_p, INPUT_DIM)

    # Main path: zero-copy grouped input, 2 batch tiles (v7x-friendly).
    out = jax.block_until_ready(policy_gradient_network(state, w1, b1, w2, b2))
    ref = reference_forward(state, w1, b1, w2, b2)
    assert out.shape == (B, 2)
    assert jnp.allclose(out, ref, atol=1e-5, rtol=1e-5)
    assert jnp.allclose(jnp.sum(out, axis=-1), 1.0, atol=1e-5)

    # Ragged batch: exercises the pad fallback and a partial last grid block.
    B2 = 100
    state2 = jax.random.normal(k_x2, (B2, INPUT_DIM), jnp.float32)
    out2 = jax.block_until_ready(policy_gradient_network(state2, w1, b1, w2, b2, tb=64))
    ref2 = reference_forward(state2, w1, b1, w2, b2)
    assert out2.shape == (B2, 2)
    assert jnp.allclose(out2, ref2, atol=1e-5, rtol=1e-5)

    print("KERNEL_OK")
</pallas_src>

<mosaic_0001>
module attributes {stable_mosaic.version = 11 : i64} {
  func.func @pgn_kernel(%arg0: i32, %arg1: memref<64x160xf32, #tpu.memory_space<vmem>>, %arg2: memref<160x32xf32, #tpu.memory_space<vmem>>, %arg3: memref<1x32xf32, #tpu.memory_space<vmem>>, %arg4: memref<32x8xf32, #tpu.memory_space<vmem>>, %arg5: memref<1x8xf32, #tpu.memory_space<vmem>>, %arg6: memref<8x16xf32, #tpu.memory_space<vmem>>, %arg7: memref<1x16xf32, #tpu.memory_space<vmem>>, %arg8: memref<64x16xf32, #tpu.memory_space<vmem>>) attributes {dimension_semantics = [#tpu.dimension_semantics<parallel>], iteration_bounds = array<i64: 2>, scalar_prefetch = 0 : i64, scratch_operands = 0 : i64, tpu.core_type = #tpu.core_type<tc>, window_params = [{transform_indices = @transform_0, window_bounds = array<i64: 64, 160>}, {pipeline_mode = #tpu.pipeline_mode<synchronous>, transform_indices = @transform_1, window_bounds = array<i64: 160, 32>}, {pipeline_mode = #tpu.pipeline_mode<synchronous>, transform_indices = @transform_2, window_bounds = array<i64: 1, 32>}, {pipeline_mode = #tpu.pipeline_mode<synchronous>, transform_indices = @transform_3, window_bounds = array<i64: 32, 8>}, {pipeline_mode = #tpu.pipeline_mode<synchronous>, transform_indices = @transform_4, window_bounds = array<i64: 1, 8>}, {pipeline_mode = #tpu.pipeline_mode<synchronous>, transform_indices = @transform_5, window_bounds = array<i64: 8, 16>}, {pipeline_mode = #tpu.pipeline_mode<synchronous>, transform_indices = @transform_6, window_bounds = array<i64: 1, 16>}, {transform_indices = @transform_7, window_bounds = array<i64: 64, 16>}]} {
    %c0 = arith.constant 0 : index
    %c0_0 = arith.constant 0 : index
    %0 = vector.load %arg1[%c0, %c0_0] : memref<64x160xf32, #tpu.memory_space<vmem>>, vector<64x160xf32>
    %c0_1 = arith.constant 0 : index
    %c0_2 = arith.constant 0 : index
    %1 = vector.load %arg2[%c0_1, %c0_2] : memref<160x32xf32, #tpu.memory_space<vmem>>, vector<160x32xf32>
    %cst = arith.constant dense<0.000000e+00> : vector<64x32xf32>
    %2 = tpu.matmul %0, %1, %cst {dimension_numbers = #tpu.dot_dimension_numbers<[1], [0], [0], [1], [0, 0, 1, 1], [], []>} : vector<64x160xf32>, vector<160x32xf32>, vector<64x32xf32> -> vector<64x32xf32>
    %c0_3 = arith.constant 0 : index
    %c0_4 = arith.constant 0 : index
    %3 = vector.load %arg3[%c0_3, %c0_4] : memref<1x32xf32, #tpu.memory_space<vmem>>, vector<1x32xf32>
    %4 = vector.broadcast %3 : vector<1x32xf32> to vector<64x32xf32>
    %5 = arith.addf %2, %4 : vector<64x32xf32>
    %6 = math.tanh %5 : vector<64x32xf32>
    %c0_5 = arith.constant 0 : index
    %c0_6 = arith.constant 0 : index
    %7 = vector.load %arg4[%c0_5, %c0_6] : memref<32x8xf32, #tpu.memory_space<vmem>>, vector<32x8xf32>
    %cst_7 = arith.constant dense<0.000000e+00> : vector<64x8xf32>
    %8 = tpu.matmul %6, %7, %cst_7 {dimension_numbers = #tpu.dot_dimension_numbers<[1], [0], [0], [1], [0, 0, 1, 1], [], []>} : vector<64x32xf32>, vector<32x8xf32>, vector<64x8xf32> -> vector<64x8xf32>
    %c0_8 = arith.constant 0 : index
    %c0_9 = arith.constant 0 : index
    %9 = vector.load %arg5[%c0_8, %c0_9] : memref<1x8xf32, #tpu.memory_space<vmem>>, vector<1x8xf32>
    %10 = vector.broadcast %9 : vector<1x8xf32> to vector<64x8xf32>
    %11 = arith.addf %8, %10 : vector<64x8xf32>
    %12 = math.exp %11 : vector<64x8xf32>
    %cst_10 = arith.constant 1.000000e+00 : f32
    %13 = vector.broadcast %cst_10 : f32 to vector<64x8xf32>
    %14 = arith.addf %13, %12 : vector<64x8xf32>
    %cst_11 = arith.constant 1.000000e+00 : f32
    %15 = vector.broadcast %cst_11 : f32 to vector<64x8xf32>
    %16 = arith.divf %15, %14 : vector<64x8xf32>
    %c0_12 = arith.constant 0 : index
    %c0_13 = arith.constant 0 : index
    %17 = vector.load %arg6[%c0_12, %c0_13] : memref<8x16xf32, #tpu.memory_space<vmem>>, vector<8x16xf32>
    %cst_14 = arith.constant dense<0.000000e+00> : vector<64x16xf32>
    %18 = tpu.matmul %16, %17, %cst_14 {dimension_numbers = #tpu.dot_dimension_numbers<[1], [0], [0], [1], [0, 0, 1, 1], [], []>} : vector<64x8xf32>, vector<8x16xf32>, vector<64x16xf32> -> vector<64x16xf32>
    %c0_15 = arith.constant 0 : index
    %c0_16 = arith.constant 0 : index
    %19 = vector.load %arg7[%c0_15, %c0_16] : memref<1x16xf32, #tpu.memory_space<vmem>>, vector<1x16xf32>
    %20 = vector.broadcast %19 : vector<1x16xf32> to vector<64x16xf32>
    %21 = arith.addf %18, %20 : vector<64x16xf32>
    %c0_17 = arith.constant 0 : index
    %c0_18 = arith.constant 0 : index
    %22 = vector.load %arg8[%c0_17, %c0_18] : memref<64x16xf32, #tpu.memory_space<vmem>>, vector<64x16xf32>
    tpu.vector_store %arg8[%c0_17, %c0_18], %21 {strides = array<i32>} : memref<64x16xf32, #tpu.memory_space<vmem>>, vector<64x16xf32>,
    return
  }
  func.func @transform_0(%arg0: i32) -> (i32, i32) {
    %c0_i32 = arith.constant 0 : i32
    %c0_i32_0 = arith.constant 0 : i32
    return %arg0, %c0_i32 : i32, i32
  }
  func.func @transform_1(%arg0: i32) -> (i32, i32) {
    %c0_i32 = arith.constant 0 : i32
    %c0_i32_0 = arith.constant 0 : i32
    %c0_i32_1 = arith.constant 0 : i32
    return %c0_i32, %c0_i32_0 : i32, i32
  }
  func.func @transform_2(%arg0: i32) -> (i32, i32) {
    %c0_i32 = arith.constant 0 : i32
    %c0_i32_0 = arith.constant 0 : i32
    %c0_i32_1 = arith.constant 0 : i32
    return %c0_i32, %c0_i32_0 : i32, i32
  }
  func.func @transform_3(%arg0: i32) -> (i32, i32) {
    %c0_i32 = arith.constant 0 : i32
    %c0_i32_0 = arith.constant 0 : i32
    %c0_i32_1 = arith.constant 0 : i32
    return %c0_i32, %c0_i32_0 : i32, i32
  }
  func.func @transform_4(%arg0: i32) -> (i32, i32) {
    %c0_i32 = arith.constant 0 : i32
    %c0_i32_0 = arith.constant 0 : i32
    %c0_i32_1 = arith.constant 0 : i32
    return %c0_i32, %c0_i32_0 : i32, i32
  }
  func.func @transform_5(%arg0: i32) -> (i32, i32) {
    %c0_i32 = arith.constant 0 : i32
    %c0_i32_0 = arith.constant 0 : i32
    %c0_i32_1 = arith.constant 0 : i32
    return %c0_i32, %c0_i32_0 : i32, i32
  }
  func.func @transform_6(%arg0: i32) -> (i32, i32) {
    %c0_i32 = arith.constant 0 : i32
    %c0_i32_0 = arith.constant 0 : i32
    %c0_i32_1 = arith.constant 0 : i32
    return %c0_i32, %c0_i32_0 : i32, i32
  }
  func.func @transform_7(%arg0: i32) -> (i32, i32) {
    %c0_i32 = arith.constant 0 : i32
    %c0_i32_0 = arith.constant 0 : i32
    return %arg0, %c0_i32 : i32, i32
  }
}

</mosaic_0001>

<llo_original>
// kernel: tpu_custom_call.1
$region0: #{tpu_custom_call.1}
  #allocation0 [shape = 'u32[]', space=smem, size = 0x4, offset = 0x4, fixed_abs, tag = 'smem constant byte address 0x4 - core index']
  #allocation1 [shape = 'u32[144,128]{1,0:T(1,128)}', space=vmem, size = 0x12000, scoped, tag = 'internal scratch']
  %s0 = inlined_call_operand.vmem [shape: f32[128,160], index: 0, kind: input, shape index: {}]
  %s1 = inlined_call_operand.vmem [shape: f32[160,32], index: 1, kind: input, shape index: {}]
  %s2 = inlined_call_operand.vmem [shape: f32[1,32], index: 2, kind: input, shape index: {}]
  %s3 = inlined_call_operand.vmem [shape: f32[32,8], index: 3, kind: input, shape index: {}]
  %s4 = inlined_call_operand.vmem [shape: f32[1,8], index: 4, kind: input, shape index: {}]
  %s5 = inlined_call_operand.vmem [shape: f32[8,16], index: 5, kind: input, shape index: {}]
  %s6 = inlined_call_operand.vmem [shape: f32[1,16], index: 6, kind: input, shape index: {}]
  %s7 = inlined_call_operand.vmem [shape: f32[128,16], index: 7, kind: output, shape index: {}]
  %s8 = sld [smem:[#allocation0]]
  $region61: #{tpu_custom_call.1} parent=0
    _
  %s10 = ssub.s32 1, %s8
  %s11 = scalar_select 0, %s10, %s8
  loop: start=0, step=1, limit=4
  $region2: #{tpu_custom_call.1} parent=0 // loop_pre_header
    _
  $region3: #{tpu_custom_call.1} parent=0 // loop_header
    %s13 = sphi 0, %s17
    %p14 = scmp.ge.s32.totalorder %s13, 4
    %s23 = sphi 0, %s25
    %s26 = sphi 0, %s23
    %s27 = sphi 0, %s26
    %s43 = sphi 0, %s27
    %s47 = sphi 0, %s47
    %s49 = sphi 0, %s47
    %s50 = sphi 0, %s49
    %s64 = sphi 0, %s50
    %s68 = sphi 0, %s68
    %s70 = sphi 0, %s68
    %s71 = sphi 0, %s70
    %s85 = sphi 0, %s71
    %s89 = sphi 0, %s89
    %s91 = sphi 0, %s89
    %s92 = sphi 0, %s91
    %s106 = sphi 0, %s92
    %s110 = sphi 0, %s110
    %s112 = sphi 0, %s110
    %s113 = sphi 0, %s112
    %s127 = sphi 0, %s113
    %s131 = sphi 0, %s131
    %s133 = sphi 0, %s131
    %s134 = sphi 0, %s133
    %s148 = sphi 0, %s134
    %s152 = sphi 0, %s152
    %s154 = sphi 0, %s152
    %s155 = sphi 0, %s154
    %s169 = sphi 0, %s155
    %s175 = sphi 0, %s177
    %s178 = sphi 0, %s175
    %s179 = sphi 0, %s178
    %s195 = sphi 0, %s179
  $region4: #{tpu_custom_call.1} parent=0 // loop_header_branch
    %16 = sbr.rel (%p14) target = $region8
  $region5: #{tpu_custom_call.1} parent=0 // loop_body
    %s18 = ssub.s32 %s13, 1
    %s19 = ssub.s32 %s13, 2
    %s20 = sadd.s32 %s13, 1
    %s21 = ssub.s32 %s13, %s20
    %p22 = scmp.eq.s32.totalorder %s21, 0
    %s24 = sadd.s32 %s23, 1
    %s25 = scalar_select %p22, %s23, %s24
    %p28 = pneg %p22
    %p29 = scmp.eq.s32.totalorder %s13, 1
    %p30 = por %p28, %p29
    %p31 = scmp.ne.s32.totalorder %s23, %s26
    %p32 = scmp.eq.s32.totalorder %s13, 0
    %p33 = por %p31, %p32
    %p34 = scmp.ne.s32.totalorder %s23, %s26
    %p35 = scmp.eq.s32.totalorder %s18, 1
    %p36 = por %p34, %p35
    %p37 = scmp.ne.s32.totalorder %s26, %s27
    %p38 = scmp.eq.s32.totalorder %s18, 0
    %p39 = por %p37, %p38
    %p40 = scmp.ne.s32.totalorder %s26, %s27
    %p41 = scmp.eq.s32.totalorder %s19, 1
    %p42 = por %p40, %p41
    %p44 = scmp.ne.s32.totalorder %s27, %s43
    %p45 = scmp.eq.s32.totalorder %s19, 0
    %p46 = por %p44, %p45
    %s48 = sadd.s32 %s47, 1
    %p51 = scmp.eq.s32.totalorder %s13, 1
    %p52 = scmp.ne.s32.totalorder %s47, %s49
    %p53 = scmp.eq.s32.totalorder %s13, 0
    %p54 = por %p52, %p53
    %p55 = scmp.ne.s32.totalorder %s47, %s49
    %p56 = scmp.eq.s32.totalorder %s18, 1
    %p57 = por %p55, %p56
    %p58 = scmp.ne.s32.totalorder %s49, %s50
    %p59 = scmp.eq.s32.totalorder %s18, 0
    %p60 = por %p58, %p59
    %p61 = scmp.ne.s32.totalorder %s49, %s50
    %p62 = scmp.eq.s32.totalorder %s19, 1
    %p63 = por %p61, %p62
    %p65 = scmp.ne.s32.totalorder %s50, %s64
    %p66 = scmp.eq.s32.totalorder %s19, 0
    %p67 = por %p65, %p66
    %s69 = sadd.s32 %s68, 1
    %p72 = scmp.eq.s32.totalorder %s13, 1
    %p73 = scmp.ne.s32.totalorder %s68, %s70
    %p74 = scmp.eq.s32.totalorder %s13, 0
    %p75 = por %p73, %p74
    %p76 = scmp.ne.s32.totalorder %s68, %s70
    %p77 = scmp.eq.s32.totalorder %s18, 1
    %p78 = por %p76, %p77
    %p79 = scmp.ne.s32.totalorder %s70, %s71
    %p80 = scmp.eq.s32.totalorder %s18, 0
    %p81 = por %p79, %p80
    %p82 = scmp.ne.s32.totalorder %s70, %s71
    %p83 = scmp.eq.s32.totalorder %s19, 1
    %p84 = por %p82, %p83
    %p86 = scmp.ne.s32.totalorder %s71, %s85
    %p87 = scmp.eq.s32.totalorder %s19, 0
    %p88 = por %p86, %p87
    %s90 = sadd.s32 %s89, 1
    %p93 = scmp.eq.s32.totalorder %s13, 1
    %p94 = scmp.ne.s32.totalorder %s89, %s91
    %p95 = scmp.eq.s32.totalorder %s13, 0
    %p96 = por %p94, %p95
    %p97 = scmp.ne.s32.totalorder %s89, %s91
    %p98 = scmp.eq.s32.totalorder %s18, 1
    %p99 = por %p97, %p98
    %p100 = scmp.ne.s32.totalorder %s91, %s92
    %p101 = scmp.eq.s32.totalorder %s18, 0
    %p102 = por %p100, %p101
    %p103 = scmp.ne.s32.totalorder %s91, %s92
    %p104 = scmp.eq.s32.totalorder %s19, 1
    %p105 = por %p103, %p104
    %p107 = scmp.ne.s32.totalorder %s92, %s106
    %p108 = scmp.eq.s32.totalorder %s19, 0
    %p109 = por %p107, %p108
    %s111 = sadd.s32 %s110, 1
    %p114 = scmp.eq.s32.totalorder %s13, 1
    %p115 = scmp.ne.s32.totalorder %s110, %s112
    %p116 = scmp.eq.s32.totalorder %s13, 0
    %p117 = por %p115, %p116
    %p118 = scmp.ne.s32.totalorder %s110, %s112
    %p119 = scmp.eq.s32.totalorder %s18, 1
    %p120 = por %p118, %p119
    %p121 = scmp.ne.s32.totalorder %s112, %s113
    %p122 = scmp.eq.s32.totalorder %s18, 0
    %p123 = por %p121, %p122
    %p124 = scmp.ne.s32.totalorder %s112, %s113
    %p125 = scmp.eq.s32.totalorder %s19, 1
    %p126 = por %p124, %p125
    %p128 = scmp.ne.s32.totalorder %s113, %s127
    %p129 = scmp.eq.s32.totalorder %s19, 0
    %p130 = por %p128, %p129
    %s132 = sadd.s32 %s131, 1
    %p135 = scmp.eq.s32.totalorder %s13, 1
    %p136 = scmp.ne.s32.totalorder %s131, %s133
    %p137 = scmp.eq.s32.totalorder %s13, 0
    %p138 = por %p136, %p137
    %p139 = scmp.ne.s32.totalorder %s131, %s133
    %p140 = scmp.eq.s32.totalorder %s18, 1
    %p141 = por %p139, %p140
    %p142 = scmp.ne.s32.totalorder %s133, %s134
    %p143 = scmp.eq.s32.totalorder %s18, 0
    %p144 = por %p142, %p143
    %p145 = scmp.ne.s32.totalorder %s133, %s134
    %p146 = scmp.eq.s32.totalorder %s19, 1
    %p147 = por %p145, %p146
    %p149 = scmp.ne.s32.totalorder %s134, %s148
    %p150 = scmp.eq.s32.totalorder %s19, 0
    %p151 = por %p149, %p150
    %s153 = sadd.s32 %s152, 1
    %p156 = scmp.eq.s32.totalorder %s13, 1
    %p157 = scmp.ne.s32.totalorder %s152, %s154
    %p158 = scmp.eq.s32.totalorder %s13, 0
    %p159 = por %p157, %p158
    %p160 = scmp.ne.s32.totalorder %s152, %s154
    %p161 = scmp.eq.s32.totalorder %s18, 1
    %p162 = por %p160, %p161
    %p163 = scmp.ne.s32.totalorder %s154, %s155
    %p164 = scmp.eq.s32.totalorder %s18, 0
    %p165 = por %p163, %p164
    %p166 = scmp.ne.s32.totalorder %s154, %s155
    %p167 = scmp.eq.s32.totalorder %s19, 1
    %p168 = por %p166, %p167
    %p170 = scmp.ne.s32.totalorder %s155, %s169
    %p171 = scmp.eq.s32.totalorder %s19, 0
    %p172 = por %p170, %p171
    %s173 = ssub.s32 %s13, %s20
    %p174 = scmp.eq.s32.totalorder %s173, 0
    %s176 = sadd.s32 %s175, 1
    %s177 = scalar_select %p174, %s175, %s176
    %p180 = pneg %p174
    %p181 = scmp.eq.s32.totalorder %s13, 1
    %p182 = por %p180, %p181
    %p183 = scmp.ne.s32.totalorder %s175, %s178
    %p184 = scmp.eq.s32.totalorder %s13, 0
    %p185 = por %p183, %p184
    %p186 = scmp.ne.s32.totalorder %s175, %s178
    %p187 = scmp.eq.s32.totalorder %s18, 1
    %p188 = por %p186, %p187
    %p189 = scmp.ne.s32.totalorder %s178, %s179
    %p190 = scmp.eq.s32.totalorder %s18, 0
    %p191 = por %p189, %p190
    %p192 = scmp.ne.s32.totalorder %s178, %s179
    %p193 = scmp.eq.s32.totalorder %s19, 1
    %p194 = por %p192, %p193
    %p196 = scmp.ne.s32.totalorder %s179, %s195
    %p197 = scmp.eq.s32.totalorder %s19, 0
    %p198 = por %p196, %p197
    %p199 = scmp.le.s32.totalorder 1, %s13
    %p200 = scmp.lt.s32.totalorder %s13, 3
    %p201 = pnand %p199, %p200
    %p202 = pneg %p201
    // Predicated region
    $region9: #{tpu_custom_call.1} parent=5 // pred_check
      _
    $region10: #{tpu_custom_call.1} parent=5 // pred_check_branch
      %204 = sbr.rel (%p201) target = $region12
    $region11: #{tpu_custom_call.1} parent=5 // pred_region
      %s205 = ssub.s32 %s13, 1
      // Predicated region
      $region13: #{tpu_custom_call.1} parent=11 // pred_check
        %p206 = pneg %p60
      $region14: #{tpu_custom_call.1} parent=11 // pred_check_branch
        %208 = sbr.rel (%p206) target = $region16
      $region15: #{tpu_custom_call.1} parent=11 // pred_region
        _
      $region16: #{tpu_custom_call.1} parent=11 // pred_fallthru
        _
      // Predicated region
      $region17: #{tpu_custom_call.1} parent=11 // pred_check
        %p209 = pneg %p81
      $region18: #{tpu_custom_call.1} parent=11 // pred_check_branch
        %211 = sbr.rel (%p209) target = $region20
      $region19: #{tpu_custom_call.1} parent=11 // pred_region
        _
      $region20: #{tpu_custom_call.1} parent=11 // pred_fallthru
        _
      // Predicated region
      $region21: #{tpu_custom_call.1} parent=11 // pred_check
        %p212 = pneg %p102
      $region22: #{tpu_custom_call.1} parent=11 // pred_check_branch
        %214 = sbr.rel (%p212) target = $region24
      $region23: #{tpu_custom_call.1} parent=11 // pred_region
        _
      $region24: #{tpu_custom_call.1} parent=11 // pred_fallthru
        _
      // Predicated region
      $region25: #{tpu_custom_call.1} parent=11 // pred_check
        %p215 = pneg %p123
      $region26: #{tpu_custom_call.1} parent=11 // pred_check_branch
        %217 = sbr.rel (%p215) target = $region28
      $region27: #{tpu_custom_call.1} parent=11 // pred_region
        _
      $region28: #{tpu_custom_call.1} parent=11 // pred_fallthru
        _
      // Predicated region
      $region29: #{tpu_custom_call.1} parent=11 // pred_check
        %p218 = pneg %p144
      $region30: #{tpu_custom_call.1} parent=11 // pred_check_branch
        %220 = sbr.rel (%p218) target = $region32
      $region31: #{tpu_custom_call.1} parent=11 // pred_region
        _
      $region32: #{tpu_custom_call.1} parent=11 // pred_fallthru
        _
      // Predicated region
      $region33: #{tpu_custom_call.1} parent=11 // pred_check
        %p221 = pneg %p165
      $region34: #{tpu_custom_call.1} parent=11 // pred_check_branch
        %223 = sbr.rel (%p221) target = $region36
      $region35: #{tpu_custom_call.1} parent=11 // pred_region
        _
      $region36: #{tpu_custom_call.1} parent=11 // pred_fallthru
        _
    $region12: #{tpu_custom_call.1} parent=5 // pred_fallthru
      _
    %p224 = scmp.lt.s32.totalorder %s13, 2
    // Predicated region
    $region37: #{tpu_custom_call.1} parent=5 // pred_check
      %p225 = pneg %p224
    $region38: #{tpu_custom_call.1} parent=5 // pred_check_branch
      %227 = sbr.rel (%p225) target = $region40
    $region39: #{tpu_custom_call.1} parent=5 // pred_region
      // Predicated region
      $region41: #{tpu_custom_call.1} parent=39 // pred_check
        %p228 = pneg %p33
      $region42: #{tpu_custom_call.1} parent=39 // pred_check_branch
        %230 = sbr.rel (%p228) target = $region44
      $region43: #{tpu_custom_call.1} parent=39 // pred_region
        %s231 = smul.u32 8, %s13
        %p232 = scmp.lt.s32.totalorder %s231, 15
        %s233 = scalar_select %p232, %s231, 15
        %s234 = smul.addr %s233, 2
        %s235 = smul.addr %s234, 8
        %s236 = scalar_lea.vmem %s0, %s235
        %s237 = smul.u32 8, %s13
      $region44: #{tpu_custom_call.1} parent=39 // pred_fallthru
        _
    $region40: #{tpu_custom_call.1} parent=5 // pred_fallthru
      _
    %p238 = scmp.le.s32.totalorder 1, %s13
    %p239 = scmp.lt.s32.totalorder %s13, 3
    %p240 = pnand %p238, %p239
    %p241 = pneg %p240
    // Predicated region
    $region45: #{tpu_custom_call.1} parent=5 // pred_check
      _
    $region46: #{tpu_custom_call.1} parent=5 // pred_check_branch
      %243 = sbr.rel (%p240) target = $region48
    $region47: #{tpu_custom_call.1} parent=5 // pred_region
      %s244 = ssub.s32 %s13, 1
      %s245 = smul.u32 8, %s18
      %p246 = scmp.lt.s32.totalorder %s245, 15
      %s247 = scalar_select %p246, %s245, 15
      %s248 = smul.addr %s247, 2
      %s249 = smul.addr %s248, 8
      %s250 = scalar_lea.vmem %s0, %s249
      %p251 = pneg %p39
      %p252 = pneg %p36
      %p253 = pneg %p60
      %p254 = pneg %p57
      %p255 = pneg %p81
      %p256 = pneg %p78
      %p257 = pneg %p102
      %p258 = pneg %p99
      %p259 = pneg %p123
      %p260 = pneg %p120
      %p261 = pneg %p144
      %p262 = pneg %p141
      %p263 = pneg %p165
      %p264 = pneg %p162
      %p265 = pneg %p191
      %p266 = pneg %p188
      %s267 = smul.u32 8, %s18
      %p268 = scmp.lt.s32.totalorder %s267, 15
      %s269 = scalar_select %p268, %s267, 15
      %s270 = smul.addr %s269, 8
      %s271 = scalar_lea.vmem %s7, %s270
      %s272 = smul.u32 8, %s18
      %p273 = scmp.lt.s32.totalorder %s272, 15
      %s274 = scalar_select %p273, %s272, 15
      %s275 = smul.addr %s274, 2
      %s276 = smul.addr %s275, 8
      %s277 = scalar_lea.vmem %s0, %s276
      %s278 = smul.u32 8, %s18
      %s279 = smul.u32 8, %s18
      %p280 = scmp.lt.s32.totalorder %s279, 15
      %s281 = scalar_select %p280, %s279, 15
      %s282 = smul.addr %s281, 8
      %s283 = scalar_lea.vmem %s7, %s282
      %s284 = smul.u32 8, %s18
      %v285 = vld [vmem:[%s277] sm:$0xff]
      %v286 = vld [vmem:[%s277 + $0x8] sm:$0xff]
      %v287 = vld [vmem:[%s277 + $0x10] sm:$0xff]
      %v288 = vld [vmem:[%s277 + $0x18] sm:$0xff]
      %v289 = vld [vmem:[%s277 + $0x20] sm:$0xff]
      %v290 = vld [vmem:[%s277 + $0x28] sm:$0xff]
      %v291 = vld [vmem:[%s277 + $0x30] sm:$0xff]
      %v292 = vld [vmem:[%s277 + $0x38] sm:$0xff]
      %v293 = vld [vmem:[%s277 + $0x40] sm:$0xff]
      %v294 = vld [vmem:[%s277 + $0x48] sm:$0xff]
      %v295 = vld [vmem:[%s277 + $0x50] sm:$0xff]
      %v296 = vld [vmem:[%s277 + $0x58] sm:$0xff]
      %v297 = vld [vmem:[%s277 + $0x60] sm:$0xff]
      %v298 = vld [vmem:[%s277 + $0x68] sm:$0xff]
      %v299 = vld [vmem:[%s277 + $0x70] sm:$0xff]
      %v300 = vld [vmem:[%s277 + $0x78] sm:$0xff]
      %v301 = vld [vmem:[%s1] sm:$0xff]
      %v302 = vld [vmem:[%s1 + $0x8] sm:$0xff]
      %v303 = vld [vmem:[%s1 + $0x10] sm:$0xff]
      %v304 = vld [vmem:[%s1 + $0x18] sm:$0xff]
      %v305 = vld [vmem:[%s1 + $0x20] sm:$0xff]
      %v306 = vld [vmem:[%s1 + $0x28] sm:$0xff]
      %v307 = vld [vmem:[%s1 + $0x30] sm:$0xff]
      %v308 = vld [vmem:[%s1 + $0x38] sm:$0xff]
      %v309 = vld [vmem:[%s1 + $0x40] sm:$0xff]
      %v310 = vld [vmem:[%s1 + $0x48] sm:$0xff]
      %v311 = vld [vmem:[%s1 + $0x50] sm:$0xff]
      %v312 = vld [vmem:[%s1 + $0x58] sm:$0xff]
      %v313 = vld [vmem:[%s1 + $0x60] sm:$0xff]
      %v314 = vld [vmem:[%s1 + $0x68] sm:$0xff]
      %v315 = vld [vmem:[%s1 + $0x70] sm:$0xff]
      %v316 = vld [vmem:[%s1 + $0x78] sm:$0xff]
      %v317 = vld [vmem:[%s1 + $0x80] sm:$0xff]
      %v318 = vld [vmem:[%s1 + $0x88] sm:$0xff]
      %v319 = vld [vmem:[%s1 + $0x90] sm:$0xff]
      %v320 = vld [vmem:[%s1 + $0x98] sm:$0xff]
      %v321 = vld [vmem:[%s2] sm:$0x1]
      %v323 = vlaneseq
      %v324 = vshrl.u32 %v323, 7
      %v325 = vsub.s32 0, %v324
      %v326 = vrot.slane %v321, %v325
      %vm328 = vcmask 261120
      %v330 = vsel %vm328, %v286, 0
      %v333 = vsel %vm328, %v288, 0
      %v336 = vsel %vm328, %v290, 0
      %v339 = vsel %vm328, %v292, 0
      %v342 = vsel %vm328, %v294, 0
      %v345 = vsel %vm328, %v296, 0
      %v348 = vsel %vm328, %v298, 0
      %v351 = vsel %vm328, %v300, 0
      %353 = vmatprep.subr.mxu0 0.0
      %354 = vmatpush1.msra.mxu0 %v301
      %355 = vmatprep.subr.mxu0 0.0
      %356 = vmatpush1.msra.mxu0 %v302
      %357 = vmatprep.subr.mxu0 0.0
      %358 = vmatpush1.msra.mxu0 %v303
      %359 = vmatprep.subr.mxu0 0.0
      %360 = vmatpush1.msra.mxu0 %v304
      %361 = vmatprep.subr.mxu0 0.0
      %362 = vmatpush1.msra.mxu0 %v305
      %363 = vmatprep.subr.mxu0 0.0
      %364 = vmatpush1.msra.mxu0 %v306
      %365 = vmatprep.subr.mxu0 0.0
      %366 = vmatpush1.msra.mxu0 %v307
      %367 = vmatprep.subr.mxu0 0.0
      %368 = vmatpush1.msra.mxu0 %v308
      %369 = vmatprep.subr.mxu0 0.0
      %370 = vmatpush1.msra.mxu0 %v309
      %371 = vmatprep.subr.mxu0 0.0
      %372 = vmatpush1.msra.mxu0 %v310
      %373 = vmatprep.subr.mxu0 0.0
      %374 = vmatpush1.msra.mxu0 %v311
      %375 = vmatprep.subr.mxu0 0.0
      %376 = vmatpush1.msra.mxu0 %v312
      %377 = vmatprep.subr.mxu0 0.0
      %378 = vmatpush1.msra.mxu0 %v313
      %379 = vmatprep.subr.mxu0 0.0
      %380 = vmatpush1.msra.mxu0 %v314
      %381 = vmatprep.subr.mxu0 0.0
      %382 = vmatpush1.msra.mxu0 %v315
      %383 = vmatprep.subr.mxu0 0.0
      %384 = vmatpush1.msra.mxu0 %v316
      %385 = vmatprep.subr.mxu0 0.0
      %386 = vmatpush1.msra.mxu0 %v317
      %387 = vmatprep.subr.mxu0 0.0
      %388 = vmatpush1.msra.mxu0 %v318
      %389 = vmatprep.subr.mxu0 0.0
      %390 = vmatpush1.msra.mxu0 %v319
      %391 = vmatprep.subr.mxu0 0.0
      %392 = vmatpush1.msra.mxu0 %v320
      %393 = vmatprep.subr.mxu0 0.0
      %394 = vmatpush1.msra.mxu0 0.0
      %395 = vmatprep.subr.mxu0 0.0
      %396 = vmatpush1.msra.mxu0 0.0
      %397 = vmatprep.subr.mxu0 0.0
      %398 = vmatpush1.msra.mxu0 0.0
      %399 = vmatprep.subr.mxu0 0.0
      %400 = vmatpush1.msra.mxu0 0.0
      %401 = vmatprep.subr.mxu0 0.0
      %402 = vmatpush1.msra.mxu0 0.0
      %403 = vmatprep.subr.mxu0 0.0
      %404 = vmatpush1.msra.mxu0 0.0
      %405 = vmatprep.subr.mxu0 0.0
      %406 = vmatpush1.msra.mxu0 0.0
      %407 = vmatprep.subr.mxu0 0.0
      %408 = vmatpush1.msra.mxu0 0.0
      %409 = vmatprep.subr.mxu0 0.0
      %410 = vmatpush1.msra.mxu0 0.0
      %411 = vmatprep.subr.mxu0 0.0
      %412 = vmatpush1.msra.mxu0 0.0
      %413 = vmatprep.subr.mxu0 0.0
      %414 = vmatpush1.msra.mxu0 0.0
      %415 = vmatprep.subr.mxu0 0.0
      %416 = vmatpush1.msra.mxu0 0.0
      %417 = vmatprep.mubr.f32.mxu0 %v330
      %418 = vmatmul.mubr.f32.gmra.mrb[0].mxu0 %v285
      %v419 = vpop.f32.mrb[0].mxu0
      %v420 = vadd.f32 %v326, %v419
      %v421 = vpop.f32.mrb[0].mxu0
      %422 = vmatprep.mubr.f32.mxu0 %v333
      %423 = vmatmul.mubr.f32.gmra.mrb[0].mxu0 %v287
      %v424 = vpop.f32.mrb[0].mxu0
      %v425 = vadd.f32 %v326, %v424
      %v426 = vpop.f32.mrb[0].mxu0
      %427 = vmatprep.mubr.f32.mxu0 %v336
      %428 = vmatmul.mubr.f32.gmra.mrb[0].mxu0 %v289
      %v429 = vpop.f32.mrb[0].mxu0
      %v430 = vadd.f32 %v326, %v429
      %v431 = vpop.f32.mrb[0].mxu0
      %432 = vmatprep.mubr.f32.mxu0 %v339
      %433 = vmatmul.mubr.f32.gmra.mrb[0].mxu0 %v291
      %v434 = vpop.f32.mrb[0].mxu0
      %v435 = vadd.f32 %v326, %v434
      %v436 = vpop.f32.mrb[0].mxu0
      %437 = vmatprep.mubr.f32.mxu0 %v342
      %438 = vmatmul.mubr.f32.gmra.mrb[0].mxu0 %v293
      %v439 = vpop.f32.mrb[0].mxu0
      %v440 = vadd.f32 %v326, %v439
      %v441 = vpop.f32.mrb[0].mxu0
      %442 = vmatprep.mubr.f32.mxu0 %v345
      %443 = vmatmul.mubr.f32.gmra.mrb[0].mxu0 %v295
      %v444 = vpop.f32.mrb[0].mxu0
      %v445 = vadd.f32 %v326, %v444
      %v446 = vpop.f32.mrb[0].mxu0
      %447 = vmatprep.mubr.f32.mxu0 %v348
      %448 = vmatmul.mubr.f32.gmra.mrb[0].mxu0 %v297
      %v449 = vpop.f32.mrb[0].mxu0
      %v450 = vadd.f32 %v326, %v449
      %v451 = vpop.f32.mrb[0].mxu0
      %452 = vmatprep.mubr.f32.mxu0 %v351
      %453 = vmatmul.mubr.f32.gmra.mrb[0].mxu0 %v299
      %v454 = vpop.f32.mrb[0].mxu0
      %v455 = vadd.f32 %v326, %v454
      %v456 = vpop.f32.mrb[0].mxu0
      %457 = vdwg.mxu0
      %v458 = vtanh.pop %v420
      %v459 = vtanh.pop %v425
      %v460 = vtanh.pop %v430
      %v461 = vtanh.pop %v435
      %v462 = vtanh.pop %v440
      %v463 = vtanh.pop %v445
      %v464 = vtanh.pop %v450
      %v465 = vtanh.pop %v455
      %v466 = vld [vmem:[%s3] sm:$0xff]
      %v467 = vld [vmem:[%s3 + $0x8] sm:$0xff]
      %v468 = vld [vmem:[%s3 + $0x10] sm:$0xff]
      %v469 = vld [vmem:[%s3 + $0x18] sm:$0xff]
      %v470 = vld [vmem:[%s4] sm:$0x1]
      %v472 = vlaneseq
      %v473 = vshrl.u32 %v472, 7
      %v474 = vsub.s32 0, %v473
      %v475 = vrot.slane %v470, %v474
      %v478 = vsel %vm328, %v458, 0
      %v481 = vsel %vm328, %v459, 0
      %v484 = vsel %vm328, %v460, 0
      %v487 = vsel %vm328, %v461, 0
      %v490 = vsel %vm328, %v462, 0
      %v493 = vsel %vm328, %v463, 0
      %v496 = vsel %vm328, %v464, 0
      %v499 = vsel %vm328, %v465, 0
      %501 = vmatprep.subr.mxu0 0.0
      %502 = vmatpush1.msra.mxu0 %v466
      %503 = vmatprep.subr.mxu0 0.0
      %504 = vmatpush1.msra.mxu0 %v467
      %505 = vmatprep.subr.mxu0 0.0
      %506 = vmatpush1.msra.mxu0 %v468
      %507 = vmatprep.subr.mxu0 0.0
      %508 = vmatpush1.msra.mxu0 %v469
      %509 = vmatprep.subr.mxu0 0.0
      %510 = vmatpush1.msra.mxu0 0.0
      %511 = vmatprep.subr.mxu0 0.0
      %512 = vmatpush1.msra.mxu0 0.0
      %513 = vmatprep.subr.mxu0 0.0
      %514 = vmatpush1.msra.mxu0 0.0
      %515 = vmatprep.subr.mxu0 0.0
      %516 = vmatpush1.msra.mxu0 0.0
      %517 = vmatprep.subr.mxu0 0.0
      %518 = vmatpush1.msra.mxu0 0.0
      %519 = vmatprep.subr.mxu0 0.0
      %520 = vmatpush1.msra.mxu0 0.0
      %521 = vmatprep.subr.mxu0 0.0
      %522 = vmatpush1.msra.mxu0 0.0
      %523 = vmatprep.subr.mxu0 0.0
      %524 = vmatpush1.msra.mxu0 0.0
      %525 = vmatprep.subr.mxu0 0.0
      %526 = vmatpush1.msra.mxu0 0.0
      %527 = vmatprep.subr.mxu0 0.0
      %528 = vmatpush1.msra.mxu0 0.0
      %529 = vmatprep.subr.mxu0 0.0
      %530 = vmatpush1.msra.mxu0 0.0
      %531 = vmatprep.subr.mxu0 0.0
      %532 = vmatpush1.msra.mxu0 0.0
      %533 = vmatprep.subr.mxu0 0.0
      %534 = vmatpush1.msra.mxu0 0.0
      %535 = vmatprep.subr.mxu0 0.0
      %536 = vmatpush1.msra.mxu0 0.0
      %537 = vmatprep.subr.mxu0 0.0
      %538 = vmatpush1.msra.mxu0 0.0
      %539 = vmatprep.subr.mxu0 0.0
      %540 = vmatpush1.msra.mxu0 0.0
      %541 = vmatprep.subr.mxu0 0.0
      %542 = vmatpush1.msra.mxu0 0.0
      %543 = vmatprep.subr.mxu0 0.0
      %544 = vmatpush1.msra.mxu0 0.0
      %545 = vmatprep.subr.mxu0 0.0
      %546 = vmatpush1.msra.mxu0 0.0
      %547 = vmatprep.subr.mxu0 0.0
      %548 = vmatpush1.msra.mxu0 0.0
      %549 = vmatprep.subr.mxu0 0.0
      %550 = vmatpush1.msra.mxu0 0.0
      %551 = vmatprep.subr.mxu0 0.0
      %552 = vmatpush1.msra.mxu0 0.0
      %553 = vmatprep.subr.mxu0 0.0
      %554 = vmatpush1.msra.mxu0 0.0
      %555 = vmatprep.subr.mxu0 0.0
      %556 = vmatpush1.msra.mxu0 0.0
      %557 = vmatprep.subr.mxu0 0.0
      %558 = vmatpush1.msra.mxu0 0.0
      %559 = vmatprep.subr.mxu0 0.0
      %560 = vmatpush1.msra.mxu0 0.0
      %561 = vmatprep.subr.mxu0 0.0
      %562 = vmatpush1.msra.mxu0 0.0
      %563 = vmatprep.subr.mxu0 0.0
      %564 = vmatpush1.msra.mxu0 0.0
      %565 = vmatprep.mubr.f32.mxu0 0.0
      %566 = vmatmul.mubr.f32.gmra.mrb[0].mxu0 %v478
      %v567 = vpop.f32.mrb[0].mxu0
      %v568 = vadd.f32 %v475, %v567
      %v569 = vpop.f32.mrb[0].mxu0
      %570 = vmatprep.mubr.f32.mxu0 0.0
      %571 = vmatmul.mubr.f32.gmra.mrb[0].mxu0 %v481
      %v572 = vpop.f32.mrb[0].mxu0
      %v573 = vadd.f32 %v475, %v572
      %v574 = vpop.f32.mrb[0].mxu0
      %575 = vmatprep.mubr.f32.mxu0 0.0
      %576 = vmatmul.mubr.f32.gmra.mrb[0].mxu0 %v484
      %v577 = vpop.f32.mrb[0].mxu0
      %v578 = vadd.f32 %v475, %v577
      %v579 = vpop.f32.mrb[0].mxu0
      %580 = vmatprep.mubr.f32.mxu0 0.0
      %581 = vmatmul.mubr.f32.gmra.mrb[0].mxu0 %v487
      %v582 = vpop.f32.mrb[0].mxu0
      %v583 = vadd.f32 %v475, %v582
      %v584 = vpop.f32.mrb[0].mxu0
      %585 = vmatprep.mubr.f32.mxu0 0.0
      %586 = vmatmul.mubr.f32.gmra.mrb[0].mxu0 %v490
      %v587 = vpop.f32.mrb[0].mxu0
      %v588 = vadd.f32 %v475, %v587
      %v589 = vpop.f32.mrb[0].mxu0
      %590 = vmatprep.mubr.f32.mxu0 0.0
      %591 = vmatmul.mubr.f32.gmra.mrb[0].mxu0 %v493
      %v592 = vpop.f32.mrb[0].mxu0
      %v593 = vadd.f32 %v475, %v592
      %v594 = vpop.f32.mrb[0].mxu0
      %595 = vmatprep.mubr.f32.mxu0 0.0
      %596 = vmatmul.mubr.f32.gmra.mrb[0].mxu0 %v496
      %v597 = vpop.f32.mrb[0].mxu0
      %v598 = vadd.f32 %v475, %v597
      %v599 = vpop.f32.mrb[0].mxu0
      %600 = vmatprep.mubr.f32.mxu0 0.0
      %601 = vmatmul.mubr.f32.gmra.mrb[0].mxu0 %v499
      %v602 = vpop.f32.mrb[0].mxu0
      %v603 = vadd.f32 %v475, %v602
      %v604 = vpop.f32.mrb[0].mxu0
      %605 = vdwg.mxu0
      %v606 = vmul.f32 %v568, 1.442695
      %v607 = vpow.pop %v606
      %v608 = vmul.f32 %v573, 1.442695
      %v609 = vpow.pop %v608
      %v610 = vmul.f32 %v578, 1.442695
      %v611 = vpow.pop %v610
      %v612 = vmul.f32 %v583, 1.442695
      %v613 = vpow.pop %v612
      %v614 = vmul.f32 %v588, 1.442695
      %v615 = vpow.pop %v614
      %v616 = vmul.f32 %v593, 1.442695
      %v617 = vpow.pop %v616
      %v618 = vmul.f32 %v598, 1.442695
      %v619 = vpow.pop %v618
      %v620 = vmul.f32 %v603, 1.442695
      %v621 = vpow.pop %v620
      %v622 = vadd.f32 %v607, 1.0
      %v623 = vadd.f32 %v609, 1.0
      %v624 = vadd.f32 %v611, 1.0
      %v625 = vadd.f32 %v613, 1.0
      %v626 = vadd.f32 %v615, 1.0
      %v627 = vadd.f32 %v617, 1.0
      %v628 = vadd.f32 %v619, 1.0
      %v629 = vadd.f32 %v621, 1.0
      %v630 = vrcp.pop %v622
      %v631 = vmul.f32 1.0, %v630
      %v632 = vrcp.pop %v623
      %v633 = vmul.f32 1.0, %v632
      %v634 = vrcp.pop %v624
      %v635 = vmul.f32 1.0, %v634
      %v636 = vrcp.pop %v625
      %v637 = vmul.f32 1.0, %v636
      %v638 = vrcp.pop %v626
      %v639 = vmul.f32 1.0, %v638
      %v640 = vrcp.pop %v627
      %v641 = vmul.f32 1.0, %v640
      %v642 = vrcp.pop %v628
      %v643 = vmul.f32 1.0, %v642
      %v644 = vrcp.pop %v629
      %v645 = vmul.f32 1.0, %v644
      %v646 = vld [vmem:[%s5] sm:$0xff]
      %v647 = vld [vmem:[%s6] sm:$0x1]
      %v649 = vlaneseq
      %v650 = vshrl.u32 %v649, 7
      %v651 = vsub.s32 0, %v650
      %v652 = vrot.slane %v647, %v651
      %vm654 = vcmask 64512
      %v656 = vsel %vm654, %v631, 0
      %v659 = vsel %vm654, %v633, 0
      %v662 = vsel %vm654, %v635, 0
      %v665 = vsel %vm654, %v637, 0
      %v668 = vsel %vm654, %v639, 0
      %v671 = vsel %vm654, %v641, 0
      %v674 = vsel %vm654, %v643, 0
      %v677 = vsel %vm654, %v645, 0
      %679 = vmatprep.subr.mxu0 0.0
      %680 = vmatpush1.msra.mxu0 %v646
      %681 = vmatprep.subr.mxu0 0.0
      %682 = vmatpush1.msra.mxu0 0.0
      %683 = vmatprep.subr.mxu0 0.0
      %684 = vmatpush1.msra.mxu0 0.0
      %685 = vmatprep.subr.mxu0 0.0
      %686 = vmatpush1.msra.mxu0 0.0
      %687 = vmatprep.subr.mxu0 0.0
      %688 = vmatpush1.msra.mxu0 0.0
      %689 = vmatprep.subr.mxu0 0.0
      %690 = vmatpush1.msra.mxu0 0.0
      %691 = vmatprep.subr.mxu0 0.0
      %692 = vmatpush1.msra.mxu0 0.0
      %693 = vmatprep.subr.mxu0 0.0
      %694 = vmatpush1.msra.mxu0 0.0
      %695 = vmatprep.subr.mxu0 0.0
      %696 = vmatpush1.msra.mxu0 0.0
      %697 = vmatprep.subr.mxu0 0.0
      %698 = vmatpush1.msra.mxu0 0.0
      %699 = vmatprep.subr.mxu0 0.0
      %700 = vmatpush1.msra.mxu0 0.0
      %701 = vmatprep.subr.mxu0 0.0
      %702 = vmatpush1.msra.mxu0 0.0
      %703 = vmatprep.subr.mxu0 0.0
      %704 = vmatpush1.msra.mxu0 0.0
      %705 = vmatprep.subr.mxu0 0.0
      %706 = vmatpush1.msra.mxu0 0.0
      %707 = vmatprep.subr.mxu0 0.0
      %708 = vmatpush1.msra.mxu0 0.0
      %709 = vmatprep.subr.mxu0 0.0
      %710 = vmatpush1.msra.mxu0 0.0
      %711 = vmatprep.subr.mxu0 0.0
      %712 = vmatpush1.msra.mxu0 0.0
      %713 = vmatprep.subr.mxu0 0.0
      %714 = vmatpush1.msra.mxu0 0.0
      %715 = vmatprep.subr.mxu0 0.0
      %716 = vmatpush1.msra.mxu0 0.0
      %717 = vmatprep.subr.mxu0 0.0
      %718 = vmatpush1.msra.mxu0 0.0
      %719 = vmatprep.subr.mxu0 0.0
      %720 = vmatpush1.msra.mxu0 0.0
      %721 = vmatprep.subr.mxu0 0.0
      %722 = vmatpush1.msra.mxu0 0.0
      %723 = vmatprep.subr.mxu0 0.0
      %724 = vmatpush1.msra.mxu0 0.0
      %725 = vmatprep.subr.mxu0 0.0
      %726 = vmatpush1.msra.mxu0 0.0
      %727 = vmatprep.subr.mxu0 0.0
      %728 = vmatpush1.msra.mxu0 0.0
      %729 = vmatprep.subr.mxu0 0.0
      %730 = vmatpush1.msra.mxu0 0.0
      %731 = vmatprep.subr.mxu0 0.0
      %732 = vmatpush1.msra.mxu0 0.0
      %733 = vmatprep.subr.mxu0 0.0
      %734 = vmatpush1.msra.mxu0 0.0
      %735 = vmatprep.subr.mxu0 0.0
      %736 = vmatpush1.msra.mxu0 0.0
      %737 = vmatprep.subr.mxu0 0.0
      %738 = vmatpush1.msra.mxu0 0.0
      %739 = vmatprep.subr.mxu0 0.0
      %740 = vmatpush1.msra.mxu0 0.0
      %741 = vmatprep.subr.mxu0 0.0
      %742 = vmatpush1.msra.mxu0 0.0
      %743 = vmatprep.mubr.f32.mxu0 0.0
      %744 = vmatmul.mubr.f32.gmra.mrb[0].mxu0 %v656
      %v745 = vpop.f32.mrb[0].mxu0
      %v746 = vadd.f32 %v652, %v745
      %v747 = vpop.f32.mrb[0].mxu0
      %748 = vmatprep.mubr.f32.mxu0 0.0
      %749 = vmatmul.mubr.f32.gmra.mrb[0].mxu0 %v659
      %v750 = vpop.f32.mrb[0].mxu0
      %v751 = vadd.f32 %v652, %v750
      %v752 = vpop.f32.mrb[0].mxu0
      %753 = vmatprep.mubr.f32.mxu0 0.0
      %754 = vmatmul.mubr.f32.gmra.mrb[0].mxu0 %v662
      %v755 = vpop.f32.mrb[0].mxu0
      %v756 = vadd.f32 %v652, %v755
      %v757 = vpop.f32.mrb[0].mxu0
      %758 = vmatprep.mubr.f32.mxu0 0.0
      %759 = vmatmul.mubr.f32.gmra.mrb[0].mxu0 %v665
      %v760 = vpop.f32.mrb[0].mxu0
      %v761 = vadd.f32 %v652, %v760
      %v762 = vpop.f32.mrb[0].mxu0
      %763 = vmatprep.mubr.f32.mxu0 0.0
      %764 = vmatmul.mubr.f32.gmra.mrb[0].mxu0 %v668
      %v765 = vpop.f32.mrb[0].mxu0
      %v766 = vadd.f32 %v652, %v765
      %v767 = vpop.f32.mrb[0].mxu0
      %768 = vmatprep.mubr.f32.mxu0 0.0
      %769 = vmatmul.mubr.f32.gmra.mrb[0].mxu0 %v671
      %v770 = vpop.f32.mrb[0].mxu0
      %v771 = vadd.f32 %v652, %v770
      %v772 = vpop.f32.mrb[0].mxu0
      %773 = vmatprep.mubr.f32.mxu0 0.0
      %774 = vmatmul.mubr.f32.gmra.mrb[0].mxu0 %v674
      %v775 = vpop.f32.mrb[0].mxu0
      %v776 = vadd.f32 %v652, %v775
      %v777 = vpop.f32.mrb[0].mxu0
      %778 = vmatprep.mubr.f32.mxu0 0.0
      %779 = vmatmul.mubr.f32.gmra.mrb[0].mxu0 %v677
      %v780 = vpop.f32.mrb[0].mxu0
      %v781 = vadd.f32 %v652, %v780
      %v782 = vpop.f32.mrb[0].mxu0
      %783 = vdwg.mxu0
      %vm784 = vcmask 130048
      %785 = vst.msk [vmem:[%s283] sm:$0xff] %vm784, %v746
      %786 = vst.msk [vmem:[%s283 + $0x8] sm:$0xff] %vm784, %v751
      %787 = vst.msk [vmem:[%s283 + $0x10] sm:$0xff] %vm784, %v756
      %788 = vst.msk [vmem:[%s283 + $0x18] sm:$0xff] %vm784, %v761
      %789 = vst.msk [vmem:[%s283 + $0x20] sm:$0xff] %vm784, %v766
      %790 = vst.msk [vmem:[%s283 + $0x28] sm:$0xff] %vm784, %v771
      %791 = vst.msk [vmem:[%s283 + $0x30] sm:$0xff] %vm784, %v776
      %792 = vst.msk [vmem:[%s283 + $0x38] sm:$0xff] %vm784, %v781
      %s793 = smul.u32 8, %s18
      %p794 = scmp.lt.s32.totalorder %s793, 15
      %s795 = scalar_select %p794, %s793, 15
      %s796 = smul.addr %s795, 8
      %s797 = scalar_lea.vmem %s7, %s796
      // Predicated region
      $region49: #{tpu_custom_call.1} parent=47 // pred_check
        %p798 = pneg %p188
      $region50: #{tpu_custom_call.1} parent=47 // pred_check_branch
        %800 = sbr.rel (%p798) target = $region52
      $region51: #{tpu_custom_call.1} parent=47 // pred_region
        %s801 = smul.u32 8, %s18
      $region52: #{tpu_custom_call.1} parent=47 // pred_fallthru
        _
    $region48: #{tpu_custom_call.1} parent=5 // pred_fallthru
      _
    %p802 = scmp.le.s32.totalorder 2, %s13
    // Predicated region
    $region53: #{tpu_custom_call.1} parent=5 // pred_check
      %p803 = pneg %p802
    $region54: #{tpu_custom_call.1} parent=5 // pred_check_branch
      %805 = sbr.rel (%p803) target = $region56
    $region55: #{tpu_custom_call.1} parent=5 // pred_region
      %s806 = ssub.s32 %s13, 2
      // Predicated region
      $region57: #{tpu_custom_call.1} parent=55 // pred_check
        %p807 = pneg %p194
      $region58: #{tpu_custom_call.1} parent=55 // pred_check_branch
        %809 = sbr.rel (%p807) target = $region60
      $region59: #{tpu_custom_call.1} parent=55 // pred_region
        %s810 = smul.u32 8, %s19
        %p811 = scmp.lt.s32.totalorder %s810, 15
        %s812 = scalar_select %p811, %s810, 15
        %s813 = smul.addr %s812, 8
        %s814 = scalar_lea.vmem %s7, %s813
      $region60: #{tpu_custom_call.1} parent=55 // pred_fallthru
        _
    $region56: #{tpu_custom_call.1} parent=5 // pred_fallthru
      _
  $region6: #{tpu_custom_call.1} parent=0 // loop_footer
    %s17 = sadd.s32 1, %s13
  $region7: #{tpu_custom_call.1} parent=0 // loop_footer_branch
    %12 = sbr.rel target = $region3
  $region8: #{tpu_custom_call.1} parent=0 // loop_exit
    _

</llo_original>
